<compile_context>
chip_gen: v5e
topology: v5e:2x2
jax: 0.10.0
libtpu: 0.0.40
codegen_flags: <defaults>
</compile_context>

<pallas_src>
import jax
import jax.numpy as jnp
from jax.experimental import pallas as pl
from jax.experimental.pallas import tpu as pltpu


def _round_up(n, m):
    return ((n + m - 1) // m) * m


def dqn_kernel(x_ref, w1_ref, b1_ref, w2_ref, b2_ref, w3_ref, b3_ref, o_ref):
    # Activations are [features, batch_tile]: batch on the 128-lane axis.
    # fc1 + leaky_relu (negative_slope=0.01, PyTorch default).
    h = jnp.dot(w1_ref[...], x_ref[...], preferred_element_type=jnp.float32)
    h = h + b1_ref[...]
    h = jnp.maximum(h, 0.01 * h)

    # fc2 + leaky_relu.  Cast back to the weight dtype so the MXU sees a
    # homogeneous-precision matmul (no-op on the f32 path); accumulation,
    # bias add and LeakyReLU stay f32.
    h = jnp.dot(w2_ref[...], h.astype(w2_ref.dtype),
                preferred_element_type=jnp.float32)
    h = h + b2_ref[...]
    h = jnp.maximum(h, 0.01 * h)

    # fc3 (no activation).
    out = jnp.dot(w3_ref[...], h.astype(w3_ref.dtype),
                  preferred_element_type=jnp.float32)
    out = out + b3_ref[...]
    o_ref[...] = out.astype(o_ref.dtype)


def dqn_forward(x, w1, b1, w2, b2, w3, b3, *,
                block_b=16384,
                compute_dtype=jnp.bfloat16,
                out_dtype=jnp.float32,
                x_transposed=False,
                x_buffers=None):
    """DQN forward pass.

    x:  [B, input_size]   (PyTorch module input layout), or [input_size, B]
                          if x_transposed=True (skips the wrapper transpose).
    w*: (out, in)          PyTorch nn.Linear weight layout.
    b*: (out,)             PyTorch nn.Linear bias layout.
    Returns [B, num_quotas] in out_dtype (default float32).

    Jit this function (with block_b / compute_dtype / out_dtype /
    x_transposed / x_buffers static) so the x prep and output un-pad fuse
    into single producer/consumer fusions.
    """
    if x_transposed:
        in_size, B = x.shape
    else:
        B, in_size = x.shape
    hid = w1.shape[0]
    nq = w3.shape[0]

    block_b = max(128, _round_up(block_b, 128))

    if B <= block_b:
        # Single-block path: pad batch to a 128-lane multiple so the output
        # store stays unmasked / lane-dense.
        tb = max(128, _round_up(B, 128))
        b_pad = tb
    else:
        # Gridded path: keep >= 2 steps (v7x megacore) and spread padding so
        # the last tile is not mostly waste.
        g = -(-B // block_b)                       # number of batch tiles
        tb = _round_up(-(-B // g), 128)            # lane-dense tile size
        b_pad = g * tb
    grid = (b_pad // tb,)

    # ---- x prep: transpose (if needed) + cast + pad in ONE expression; under
    # jit this fuses into a single producer (one extra HBM pass, not three).
    xT = x if x_transposed else x.T                # [in_size, B]
    xT = xT.astype(compute_dtype)
    if b_pad != B:
        xT = jnp.pad(xT, ((0, 0), (0, b_pad - B)))

    # Weights: compute_dtype for the MXU; biases stay f32 column vectors.
    w1c = w1.astype(compute_dtype)
    w2c = w2.astype(compute_dtype)
    w3c = w3.astype(compute_dtype)
    b1c = b1.reshape(hid, 1).astype(jnp.float32)
    b2c = b2.reshape(hid, 1).astype(jnp.float32)
    b3c = b3.reshape(nq, 1).astype(jnp.float32)

    # Weights / biases: whole-array VMEM residents (grid-invariant, ~7 KiB).
    vmem_full = pl.BlockSpec(memory_space=pltpu.MemorySpace.VMEM)

    # Streamed x operand; optional deeper buffering (only if profiling shows
    # exposed DMA at tile boundaries).
    x_spec_kwargs = {}
    if x_buffers is not None and x_buffers != 2:
        x_spec_kwargs["pipeline_mode"] = pl.Buffered(x_buffers)
    x_spec = pl.BlockSpec((in_size, tb), lambda i: (0, i), **x_spec_kwargs)

    # Scoped-VMEM guard: only relevant for very large f32 tiles on v5e's
    # 16 MiB scoped default; never triggers at the defaults above.
    x_bytes = jnp.dtype(compute_dtype).itemsize
    o_bytes = jnp.dtype(out_dtype).itemsize
    nbuf = x_buffers if x_buffers is not None else 2
    vmem_est = (nbuf * in_size * tb * x_bytes
                + 2 * nq * tb * o_bytes
                + (in_size + hid + nq) * hid * x_bytes
                + 4096)
    cp_kwargs = dict(dimension_semantics=("parallel",))
    if vmem_est > 12 * 1024 * 1024:
        cp_kwargs["vmem_limit_bytes"] = int(vmem_est) + (8 << 20)

    outT = pl.pallas_call(
        dqn_kernel,
        out_shape=jax.ShapeDtypeStruct((nq, b_pad), out_dtype),
        grid=grid,
        in_specs=[
            x_spec,                      # x: batch-blocked, streamed
            vmem_full, vmem_full,        # w1, b1
            vmem_full, vmem_full,        # w2, b2
            vmem_full, vmem_full,        # w3, b3
        ],
        out_specs=pl.BlockSpec((nq, tb), lambda i: (0, i)),
        compiler_params=pltpu.CompilerParams(**cp_kwargs),
    )(xT, w1c, b1c, w2c, b2c, w3c, b3c)

    # Drop batch padding, return module-native [B, num_quotas] (slice +
    # transpose fuse into one small copy under jit).
    return outT[:, :B].T


def dqn_reference(x, w1, b1, w2, b2, w3, b3):
    leaky = lambda v: jnp.where(v > 0, v, 0.01 * v)
    h = leaky(x @ w1.T + b1)
    h = leaky(h @ w2.T + b2)
    return h @ w3.T + b3


if __name__ == "__main__":
    input_size, hidden_size, num_quotas = 16, 32, 8

    key = jax.random.PRNGKey(0)
    kx, k1, kb1, k2, kb2, k3, kb3, kx2 = jax.random.split(key, 8)

    # PyTorch-native parameter layouts: weight (out, in), bias (out,).
    w1 = jax.random.normal(k1, (hidden_size, input_size), jnp.float32) * 0.1
    b1 = jax.random.normal(kb1, (hidden_size,), jnp.float32) * 0.1
    w2 = jax.random.normal(k2, (hidden_size, hidden_size), jnp.float32) * 0.1
    b2 = jax.random.normal(kb2, (hidden_size,), jnp.float32) * 0.1
    w3 = jax.random.normal(k3, (num_quotas, hidden_size), jnp.float32) * 0.1
    b3 = jax.random.normal(kb3, (num_quotas,), jnp.float32) * 0.1

    # Jit the whole forward so x prep (transpose+cast+pad) and the output
    # un-pad fuse into single fusions around the pallas_call.
    fwd = jax.jit(dqn_forward,
                  static_argnames=("block_b", "compute_dtype", "out_dtype",
                                   "x_transposed", "x_buffers"))

    # 1) Tiny batch, default path (bf16 streaming, single 128-lane block).
    x_small = jax.random.normal(kx, (2, input_size), jnp.float32)
    ref_small = dqn_reference(x_small, w1, b1, w2, b2, w3, b3)
    out_small = jax.block_until_ready(fwd(x_small, w1, b1, w2, b2, w3, b3))
    assert out_small.shape == (2, num_quotas)
    assert out_small.dtype == jnp.float32
    assert jnp.allclose(out_small, ref_small, atol=5e-2, rtol=5e-2), \
        "bf16 tiny-batch mismatch vs reference"

    # 2) Tiny batch, exact f32 escape hatch, tight tolerance.
    out_small_f32 = jax.block_until_ready(
        fwd(x_small, w1, b1, w2, b2, w3, b3, compute_dtype=jnp.float32))
    assert jnp.allclose(out_small_f32, ref_small, atol=1e-4, rtol=1e-4), \
        "f32 tiny-batch mismatch vs reference"

    # 3) Batched path, f32, block_b=128 to exercise the batch grid (3 steps)
    #    and the 300 -> 384 lane padding.
    x_big = jax.random.normal(kx2, (300, input_size), jnp.float32)
    ref_big = dqn_reference(x_big, w1, b1, w2, b2, w3, b3)
    out_f32 = jax.block_until_ready(
        fwd(x_big, w1, b1, w2, b2, w3, b3, block_b=128,
            compute_dtype=jnp.float32))
    assert out_f32.shape == (300, num_quotas)
    assert jnp.allclose(out_f32, ref_big, atol=1e-4, rtol=1e-4), \
        "f32 gridded mismatch vs reference"

    # 4) Batched path, default bf16 streaming + default (large) tile.
    out_bf16 = jax.block_until_ready(fwd(x_big, w1, b1, w2, b2, w3, b3))
    assert jnp.allclose(out_bf16, ref_big, atol=5e-2, rtol=5e-2), \
        "bf16 default-path mismatch vs reference"

    # 5) Batched path, bf16 streaming + bf16 output, gridded.
    out_bf16o = jax.block_until_ready(
        fwd(x_big, w1, b1, w2, b2, w3, b3, block_b=128,
            out_dtype=jnp.bfloat16))
    assert out_bf16o.dtype == jnp.bfloat16
    assert jnp.allclose(out_bf16o.astype(jnp.float32), ref_big,
                        atol=5e-2, rtol=5e-2), \
        "bf16-out gridded mismatch vs reference"

    print("KERNEL_OK")
</pallas_src>

<mosaic_0001>
module attributes {stable_mosaic.version = 11 : i64} {
  func.func @dqn_kernel(%arg0: i32, %arg1: memref<16x128xbf16, #tpu.memory_space<vmem>>, %arg2: memref<32x16xbf16, #tpu.memory_space<vmem>>, %arg3: memref<32x1xf32, #tpu.memory_space<vmem>>, %arg4: memref<32x32xbf16, #tpu.memory_space<vmem>>, %arg5: memref<32x1xf32, #tpu.memory_space<vmem>>, %arg6: memref<8x32xbf16, #tpu.memory_space<vmem>>, %arg7: memref<8x1xf32, #tpu.memory_space<vmem>>, %arg8: memref<8x128xf32, #tpu.memory_space<vmem>>) attributes {dimension_semantics = [#tpu.dimension_semantics<parallel>], iteration_bounds = array<i64: 1>, scalar_prefetch = 0 : i64, scratch_operands = 0 : i64, tpu.core_type = #tpu.core_type<tc>, window_params = [{transform_indices = @transform_0, window_bounds = array<i64: 16, 128>}, {pipeline_mode = #tpu.pipeline_mode<synchronous>, transform_indices = @transform_1, window_bounds = array<i64: 32, 16>}, {pipeline_mode = #tpu.pipeline_mode<synchronous>, transform_indices = @transform_2, window_bounds = array<i64: 32, 1>}, {pipeline_mode = #tpu.pipeline_mode<synchronous>, transform_indices = @transform_3, window_bounds = array<i64: 32, 32>}, {pipeline_mode = #tpu.pipeline_mode<synchronous>, transform_indices = @transform_4, window_bounds = array<i64: 32, 1>}, {pipeline_mode = #tpu.pipeline_mode<synchronous>, transform_indices = @transform_5, window_bounds = array<i64: 8, 32>}, {pipeline_mode = #tpu.pipeline_mode<synchronous>, transform_indices = @transform_6, window_bounds = array<i64: 8, 1>}, {transform_indices = @transform_7, window_bounds = array<i64: 8, 128>}]} {
    %c0 = arith.constant 0 : index
    %c0_0 = arith.constant 0 : index
    %0 = vector.load %arg2[%c0, %c0_0] : memref<32x16xbf16, #tpu.memory_space<vmem>>, vector<32x16xbf16>
    %c0_1 = arith.constant 0 : index
    %c0_2 = arith.constant 0 : index
    %1 = vector.load %arg1[%c0_1, %c0_2] : memref<16x128xbf16, #tpu.memory_space<vmem>>, vector<16x128xbf16>
    %cst = arith.constant dense<0.000000e+00> : vector<32x128xf32>
    %2 = tpu.matmul %0, %1, %cst {dimension_numbers = #tpu.dot_dimension_numbers<[1], [0], [0], [1], [0, 0, 1, 1], [], []>} : vector<32x16xbf16>, vector<16x128xbf16>, vector<32x128xf32> -> vector<32x128xf32>
    %c0_3 = arith.constant 0 : index
    %c0_4 = arith.constant 0 : index
    %3 = vector.load %arg3[%c0_3, %c0_4] : memref<32x1xf32, #tpu.memory_space<vmem>>, vector<32x1xf32>
    %4 = vector.broadcast %3 : vector<32x1xf32> to vector<32x128xf32>
    %5 = arith.addf %2, %4 : vector<32x128xf32>
    %cst_5 = arith.constant 0.00999999977 : f32
    %6 = vector.broadcast %cst_5 : f32 to vector<32x128xf32>
    %7 = arith.mulf %6, %5 : vector<32x128xf32>
    %8 = arith.maximumf %5, %7 : vector<32x128xf32>
    %c0_6 = arith.constant 0 : index
    %c0_7 = arith.constant 0 : index
    %9 = vector.load %arg4[%c0_6, %c0_7] : memref<32x32xbf16, #tpu.memory_space<vmem>>, vector<32x32xbf16>
    %10 = arith.truncf %8 : vector<32x128xf32> to vector<32x128xbf16>
    %cst_8 = arith.constant dense<0.000000e+00> : vector<32x128xf32>
    %11 = tpu.matmul %9, %10, %cst_8 {dimension_numbers = #tpu.dot_dimension_numbers<[1], [0], [0], [1], [0, 0, 1, 1], [], []>} : vector<32x32xbf16>, vector<32x128xbf16>, vector<32x128xf32> -> vector<32x128xf32>
    %c0_9 = arith.constant 0 : index
    %c0_10 = arith.constant 0 : index
    %12 = vector.load %arg5[%c0_9, %c0_10] : memref<32x1xf32, #tpu.memory_space<vmem>>, vector<32x1xf32>
    %13 = vector.broadcast %12 : vector<32x1xf32> to vector<32x128xf32>
    %14 = arith.addf %11, %13 : vector<32x128xf32>
    %cst_11 = arith.constant 0.00999999977 : f32
    %15 = vector.broadcast %cst_11 : f32 to vector<32x128xf32>
    %16 = arith.mulf %15, %14 : vector<32x128xf32>
    %17 = arith.maximumf %14, %16 : vector<32x128xf32>
    %c0_12 = arith.constant 0 : index
    %c0_13 = arith.constant 0 : index
    %18 = vector.load %arg6[%c0_12, %c0_13] : memref<8x32xbf16, #tpu.memory_space<vmem>>, vector<8x32xbf16>
    %19 = arith.truncf %17 : vector<32x128xf32> to vector<32x128xbf16>
    %cst_14 = arith.constant dense<0.000000e+00> : vector<8x128xf32>
    %20 = tpu.matmul %18, %19, %cst_14 {dimension_numbers = #tpu.dot_dimension_numbers<[1], [0], [0], [1], [0, 0, 1, 1], [], []>} : vector<8x32xbf16>, vector<32x128xbf16>, vector<8x128xf32> -> vector<8x128xf32>
    %c0_15 = arith.constant 0 : index
    %c0_16 = arith.constant 0 : index
    %21 = vector.load %arg7[%c0_15, %c0_16] : memref<8x1xf32, #tpu.memory_space<vmem>>, vector<8x1xf32>
    %22 = vector.broadcast %21 : vector<8x1xf32> to vector<8x128xf32>
    %23 = arith.addf %20, %22 : vector<8x128xf32>
    %c0_17 = arith.constant 0 : index
    %c0_18 = arith.constant 0 : index
    %24 = vector.load %arg8[%c0_17, %c0_18] : memref<8x128xf32, #tpu.memory_space<vmem>>, vector<8x128xf32>
    tpu.vector_store %arg8[%c0_17, %c0_18], %23 {strides = array<i32>} : memref<8x128xf32, #tpu.memory_space<vmem>>, vector<8x128xf32>,
    return
  }
  func.func @transform_0(%arg0: i32) -> (i32, i32) {
    %c0_i32 = arith.constant 0 : i32
    %c0_i32_0 = arith.constant 0 : i32
    return %c0_i32, %arg0 : i32, i32
  }
  func.func @transform_1(%arg0: i32) -> (i32, i32) {
    %c0_i32 = arith.constant 0 : i32
    %c0_i32_0 = arith.constant 0 : i32
    %c0_i32_1 = arith.constant 0 : i32
    return %c0_i32, %c0_i32_0 : i32, i32
  }
  func.func @transform_2(%arg0: i32) -> (i32, i32) {
    %c0_i32 = arith.constant 0 : i32
    %c0_i32_0 = arith.constant 0 : i32
    %c0_i32_1 = arith.constant 0 : i32
    return %c0_i32, %c0_i32_0 : i32, i32
  }
  func.func @transform_3(%arg0: i32) -> (i32, i32) {
    %c0_i32 = arith.constant 0 : i32
    %c0_i32_0 = arith.constant 0 : i32
    %c0_i32_1 = arith.constant 0 : i32
    return %c0_i32, %c0_i32_0 : i32, i32
  }
  func.func @transform_4(%arg0: i32) -> (i32, i32) {
    %c0_i32 = arith.constant 0 : i32
    %c0_i32_0 = arith.constant 0 : i32
    %c0_i32_1 = arith.constant 0 : i32
    return %c0_i32, %c0_i32_0 : i32, i32
  }
  func.func @transform_5(%arg0: i32) -> (i32, i32) {
    %c0_i32 = arith.constant 0 : i32
    %c0_i32_0 = arith.constant 0 : i32
    %c0_i32_1 = arith.constant 0 : i32
    return %c0_i32, %c0_i32_0 : i32, i32
  }
  func.func @transform_6(%arg0: i32) -> (i32, i32) {
    %c0_i32 = arith.constant 0 : i32
    %c0_i32_0 = arith.constant 0 : i32
    %c0_i32_1 = arith.constant 0 : i32
    return %c0_i32, %c0_i32_0 : i32, i32
  }
  func.func @transform_7(%arg0: i32) -> (i32, i32) {
    %c0_i32 = arith.constant 0 : i32
    %c0_i32_0 = arith.constant 0 : i32
    return %c0_i32, %arg0 : i32, i32
  }
}

</mosaic_0001>

<llo_original>
// kernel: dqn_forward.1
$region0: #{dqn_forward.1}
  #allocation0 [shape = 'u32[]', space=smem, size = 0x4, offset = 0x4, fixed_abs, tag = 'smem constant byte address 0x4 - core index']
  #allocation1 [shape = 'u32[72,128]{1,0:T(1,128)}', space=vmem, size = 0x9000, scoped, tag = 'internal scratch']
  %s0 = inlined_call_operand.vmem [shape: bf16[16,128], index: 0, kind: input, shape index: {}]
  %s1 = inlined_call_operand.vmem [shape: bf16[32,16], index: 1, kind: input, shape index: {}]
  %s2 = inlined_call_operand.vmem [shape: f32[32,1], index: 2, kind: input, shape index: {}]
  %s3 = inlined_call_operand.vmem [shape: bf16[32,32], index: 3, kind: input, shape index: {}]
  %s4 = inlined_call_operand.vmem [shape: f32[32,1], index: 4, kind: input, shape index: {}]
  %s5 = inlined_call_operand.vmem [shape: bf16[8,32], index: 5, kind: input, shape index: {}]
  %s6 = inlined_call_operand.vmem [shape: f32[8,1], index: 6, kind: input, shape index: {}]
  %s7 = inlined_call_operand.vmem [shape: f32[8,128], index: 7, kind: output, shape index: {}]
  %s8 = sld [smem:[#allocation0]]
  $region38: #{dqn_forward.1} parent=0
    _
  %s10 = ssub.s32 1, %s8
  %s11 = scalar_select 0, %s10, %s8
  // Predicated region
  $region2: #{dqn_forward.1} parent=0 // pred_check
    _
  $region3: #{dqn_forward.1} parent=0 // pred_check_branch
    %13 = sbr.rel (0) target = $region5
  $region4: #{dqn_forward.1} parent=0 // pred_region
    _
  $region5: #{dqn_forward.1} parent=0 // pred_fallthru
    _
  // Predicated region
  $region6: #{dqn_forward.1} parent=0 // pred_check
    _
  $region7: #{dqn_forward.1} parent=0 // pred_check_branch
    %15 = sbr.rel (0) target = $region9
  $region8: #{dqn_forward.1} parent=0 // pred_region
    _
  $region9: #{dqn_forward.1} parent=0 // pred_fallthru
    _
  // Predicated region
  $region10: #{dqn_forward.1} parent=0 // pred_check
    _
  $region11: #{dqn_forward.1} parent=0 // pred_check_branch
    %17 = sbr.rel (0) target = $region13
  $region12: #{dqn_forward.1} parent=0 // pred_region
    _
  $region13: #{dqn_forward.1} parent=0 // pred_fallthru
    _
  // Predicated region
  $region14: #{dqn_forward.1} parent=0 // pred_check
    _
  $region15: #{dqn_forward.1} parent=0 // pred_check_branch
    %19 = sbr.rel (0) target = $region17
  $region16: #{dqn_forward.1} parent=0 // pred_region
    _
  $region17: #{dqn_forward.1} parent=0 // pred_fallthru
    _
  // Predicated region
  $region18: #{dqn_forward.1} parent=0 // pred_check
    _
  $region19: #{dqn_forward.1} parent=0 // pred_check_branch
    %21 = sbr.rel (0) target = $region21
  $region20: #{dqn_forward.1} parent=0 // pred_region
    _
  $region21: #{dqn_forward.1} parent=0 // pred_fallthru
    _
  // Predicated region
  $region22: #{dqn_forward.1} parent=0 // pred_check
    _
  $region23: #{dqn_forward.1} parent=0 // pred_check_branch
    %23 = sbr.rel (0) target = $region25
  $region24: #{dqn_forward.1} parent=0 // pred_region
    _
  $region25: #{dqn_forward.1} parent=0 // pred_fallthru
    _
  // Predicated region
  $region26: #{dqn_forward.1} parent=0 // pred_check
    _
  $region27: #{dqn_forward.1} parent=0 // pred_check_branch
    %25 = sbr.rel (0) target = $region29
  $region28: #{dqn_forward.1} parent=0 // pred_region
    _
  $region29: #{dqn_forward.1} parent=0 // pred_fallthru
    _
  %v27 = vld [vmem:[%s1] sm:$0xf]
  %v28 = vld [vmem:[%s1 + $0x4] sm:$0xf]
  %v29 = vld [vmem:[%s1 + $0x8] sm:$0xf]
  %v30 = vld [vmem:[%s1 + $0xc] sm:$0xf]
  %v31 = vld [vmem:[%s0] sm:$0xf]
  %v32 = vld [vmem:[%s0 + $0x4] sm:$0xf]
  %v33 = vld [vmem:[%s2] sm:$0xff]
  %v34 = vld [vmem:[%s2 + $0x8] sm:$0xff]
  %v35 = vld [vmem:[%s2 + $0x10] sm:$0xff]
  %v36 = vld [vmem:[%s2 + $0x18] sm:$0xff]
  %38 = vset.pattern.permute.xlu0 0
  %39 = vperm.xlu0 %38, %v33
  %v40 = vpop.permute.xlu0 %39
  %43 = vset.pattern.permute.xlu0 0
  %44 = vperm.xlu0 %43, %v34
  %v45 = vpop.permute.xlu0 %44
  %48 = vset.pattern.permute.xlu0 0
  %49 = vperm.xlu0 %48, %v35
  %v50 = vpop.permute.xlu0 %49
  %53 = vset.pattern.permute.xlu0 0
  %54 = vperm.xlu0 %53, %v36
  %v55 = vpop.permute.xlu0 %54
  %v61 = vunpack.c.l.b16 %v27
  %v62 = vunpack.c.l.b16 %v28
  %v63 = vunpack.c.l.b16 %v29
  %v64 = vunpack.c.l.b16 %v30
  %v65 = vpack.c.b16 %v62, %v61
  %v66 = vpack.c.b16 %v64, %v63
  %v69 = vunpack.c.l.b16 %v31
  %v70 = vunpack.c.l.b16 %v32
  %v71 = vpack.c.b16 %v70, %v69
  %vm73 = vcmask 130048
  %v75 = vsel %vm73, %v65, 0
  %v78 = vsel %vm73, %v66, 0
  %80 = vmatpush.bf16.msra.mxu0 0
  %81 = vmatpush.bf16.msra.mxu0 0
  %82 = vmatpush.bf16.msra.mxu0 0
  %83 = vmatpush.bf16.msra.mxu0 0
  %84 = vmatpush.bf16.msra.mxu0 0
  %85 = vmatpush.bf16.msra.mxu0 0
  %86 = vmatpush.bf16.msra.mxu0 0
  %87 = vmatpush.bf16.msra.mxu0 %v71
  %88 = vmatmul.bf16.gmra.mxu0 %v75
  %v89 = vpop.f32.mrf.mxu0
  %v90 = vadd.f32 %v40, %v89
  %v91 = vpop.f32.mrf.mxu0
  %v92 = vadd.f32 %v45, %v91
  %93 = vmatmul.bf16.gmra.mxu0 %v78
  %v94 = vpop.f32.mrf.mxu0
  %v95 = vadd.f32 %v50, %v94
  %v96 = vpop.f32.mrf.mxu0
  %v97 = vadd.f32 %v55, %v96
  %98 = vdwg.mxu0
  %v99 = vmul.f32 %v90, 0.01
  %v100 = vmul.f32 %v92, 0.01
  %v101 = vmul.f32 %v95, 0.01
  %v102 = vmul.f32 %v97, 0.01
  %v103 = vmax.f32 %v90, %v99
  %v104 = vmax.f32 %v92, %v100
  %v105 = vmax.f32 %v95, %v101
  %v106 = vmax.f32 %v97, %v102
  %v107 = vld [vmem:[%s3] sm:$0xf]
  %v108 = vld [vmem:[%s3 + $0x4] sm:$0xf]
  %v109 = vld [vmem:[%s3 + $0x8] sm:$0xf]
  %v110 = vld [vmem:[%s3 + $0xc] sm:$0xf]
  %v111 = vpack.c.bf16 %v104, %v103
  %v112 = vpack.c.bf16 %v106, %v105
  %v113 = vld [vmem:[%s4] sm:$0xff]
  %v114 = vld [vmem:[%s4 + $0x8] sm:$0xff]
  %v115 = vld [vmem:[%s4 + $0x10] sm:$0xff]
  %v116 = vld [vmem:[%s4 + $0x18] sm:$0xff]
  %118 = vset.pattern.permute.xlu0 0
  %119 = vperm.xlu0 %118, %v113
  %v120 = vpop.permute.xlu0 %119
  %123 = vset.pattern.permute.xlu0 0
  %124 = vperm.xlu0 %123, %v114
  %v125 = vpop.permute.xlu0 %124
  %128 = vset.pattern.permute.xlu0 0
  %129 = vperm.xlu0 %128, %v115
  %v130 = vpop.permute.xlu0 %129
  %133 = vset.pattern.permute.xlu0 0
  %134 = vperm.xlu0 %133, %v116
  %v135 = vpop.permute.xlu0 %134
  %v141 = vunpack.c.l.b16 %v107
  %v142 = vunpack.c.l.b16 %v108
  %v143 = vunpack.c.l.b16 %v109
  %v144 = vunpack.c.l.b16 %v110
  %v145 = vpack.c.b16 %v142, %v141
  %v146 = vpack.c.b16 %v144, %v143
  %vm147 = vcmask 261120
  %v149 = vsel %vm147, %v145, 0
  %v152 = vsel %vm147, %v146, 0
  %154 = vmatpush.bf16.msra.mxu0 0
  %155 = vmatpush.bf16.msra.mxu0 0
  %156 = vmatpush.bf16.msra.mxu0 0
  %157 = vmatpush.bf16.msra.mxu0 0
  %158 = vmatpush.bf16.msra.mxu0 0
  %159 = vmatpush.bf16.msra.mxu0 0
  %160 = vmatpush.bf16.msra.mxu0 %v112
  %161 = vmatpush.bf16.msra.mxu0 %v111
  %162 = vmatmul.bf16.gmra.mxu0 %v149
  %v163 = vpop.f32.mrf.mxu0
  %v164 = vadd.f32 %v120, %v163
  %v165 = vpop.f32.mrf.mxu0
  %v166 = vadd.f32 %v125, %v165
  %167 = vmatmul.bf16.gmra.mxu0 %v152
  %v168 = vpop.f32.mrf.mxu0
  %v169 = vadd.f32 %v130, %v168
  %v170 = vpop.f32.mrf.mxu0
  %v171 = vadd.f32 %v135, %v170
  %172 = vdwg.mxu0
  %v173 = vmul.f32 %v164, 0.01
  %v174 = vmul.f32 %v166, 0.01
  %v175 = vmul.f32 %v169, 0.01
  %v176 = vmul.f32 %v171, 0.01
  %v177 = vmax.f32 %v164, %v173
  %v178 = vmax.f32 %v166, %v174
  %v179 = vmax.f32 %v169, %v175
  %v180 = vmax.f32 %v171, %v176
  %v181 = vld [vmem:[%s5] sm:$0xf]
  %v182 = vpack.c.bf16 %v178, %v177
  %v183 = vpack.c.bf16 %v180, %v179
  %v184 = vld [vmem:[%s6] sm:$0xff]
  %186 = vset.pattern.permute.xlu0 0
  %187 = vperm.xlu0 %186, %v184
  %v188 = vpop.permute.xlu0 %187
  %v191 = vsel %vm147, %v181, 0
  %193 = vmatpush.bf16.msra.mxu0 0
  %194 = vmatpush.bf16.msra.mxu0 0
  %195 = vmatpush.bf16.msra.mxu0 0
  %196 = vmatpush.bf16.msra.mxu0 0
  %197 = vmatpush.bf16.msra.mxu0 0
  %198 = vmatpush.bf16.msra.mxu0 0
  %199 = vmatpush.bf16.msra.mxu0 %v183
  %200 = vmatpush.bf16.msra.mxu0 %v182
  %201 = vmatmul.bf16.gmra.mxu0 %v191
  %v202 = vpop.f32.mrf.mxu0
  %v203 = vadd.f32 %v188, %v202
  %v204 = vpop.f32.mrf.mxu0
  %205 = vdwg.mxu0
  %206 = vst [vmem:[%s7] sm:$0xff] %v203
  // Predicated region
  $region30: #{dqn_forward.1} parent=0 // pred_check
    _
  $region31: #{dqn_forward.1} parent=0 // pred_check_branch
    %208 = sbr.rel (0) target = $region33
  $region32: #{dqn_forward.1} parent=0 // pred_region
    _
  $region33: #{dqn_forward.1} parent=0 // pred_fallthru
    _
  // Predicated region
  $region34: #{dqn_forward.1} parent=0 // pred_check
    _
  $region35: #{dqn_forward.1} parent=0 // pred_check_branch
    %210 = sbr.rel (0) target = $region37
  $region36: #{dqn_forward.1} parent=0 // pred_region
    _
  $region37: #{dqn_forward.1} parent=0 // pred_fallthru
    _

</llo_original>
